<compile_context>
chip_gen: v7x
topology: tpu7x:2x2x1
jax: 0.10.0
libtpu: 0.0.40
codegen_flags: <defaults>
</compile_context>

<pallas_src>
import functools

import jax
import jax.numpy as jnp
from jax.experimental import pallas as pl
from jax.experimental.pallas import tpu as pltpu


def _round_up(x: int, m: int) -> int:
    return ((x + m - 1) // m) * m


def _make_concat_pool_kernel(hw: int, use_mxu_sum: bool):
    inv_hw = 1.0 / float(hw)

    def kernel(x_ref, out_ref):
        # x_ref: (TILE_BC, HW) tile in VMEM, native dtype.
        x = x_ref[...]

        # Global max per row: XLU cross-lane reduce, native dtype (matches
        # PyTorch AdaptiveMaxPool2d semantics).
        row_max = jnp.max(x, axis=-1, keepdims=True)

        if use_mxu_sum:
            # Small HW: do the sum on the otherwise-idle MXU so the XLU only
            # has to serve the max. f32 accumulation comes for free via
            # preferred_element_type (no explicit f32 copy of the tile).
            ones = jnp.ones((hw, 1), dtype=x.dtype)
            row_sum = jnp.dot(x, ones, preferred_element_type=jnp.float32)
        else:
            # Large HW: VPU partial adds dominate anyway; accumulate in f32.
            row_sum = jnp.sum(x, axis=-1, keepdims=True, dtype=jnp.float32)

        # Multiply by precomputed reciprocal instead of dividing.
        row_avg = (row_sum * inv_hw).astype(out_ref.dtype)

        # Single merged store: col 0 = max, col 1 = avg.
        out_ref[...] = jnp.concatenate(
            [row_max.astype(out_ref.dtype), row_avg], axis=-1
        )

    return kernel


@functools.partial(jax.jit, static_argnames=("output_size",))
def adaptive_concat_pool2d(x: jax.Array, output_size: int = 1) -> jax.Array:
    """Equivalent of fastai AdaptiveConcatPool2d for output_size=1.

    x: (B, C, H, W) -> (B, 2*C, output_size, output_size)
    """
    # TODO(synk): only output_size=1 (the module default / typical use) is
    # implemented; general adaptive region pooling is not.
    assert output_size == 1, "only output_size=1 is supported"

    B, C, H, W = x.shape
    BC, HW = B * C, H * W
    dtype = x.dtype
    dtype_bytes = jnp.dtype(dtype).itemsize

    # --- Tile sizing ---------------------------------------------------
    # VMEM bytes per input buffer ~= TILE_BC * round_up(HW, 128) * itemsize
    # (lanes pad to 128). Target ~4 MiB per buffer so that, double-buffered,
    # the kernel stays well inside the default scoped VMEM on every
    # generation (v5e 16 MiB, v6e/v7x 32 MiB) while still amortizing the
    # ~0.35 us per-grid-step overhead (~85% of HBM roofline class).
    padded_hw = _round_up(HW, 128)
    row_align = max(8, 32 // dtype_bytes)  # 8 rows f32, 16 bf16, 32 int8
    target_bytes = 4 * 1024 * 1024
    tile_bc = target_bytes // (padded_hw * dtype_bytes)
    tile_bc = max(row_align, (tile_bc // row_align) * row_align)
    tile_bc = min(tile_bc, _round_up(BC, row_align))

    bc_padded = _round_up(BC, tile_bc)
    n_tiles = bc_padded // tile_bc

    x2d = x.reshape(BC, HW)
    if bc_padded != BC:
        # Pad rows; each row is reduced independently, padded rows are
        # discarded after the call.
        x2d = jnp.pad(x2d, ((0, bc_padded - BC), (0, 0)))

    # Small spatial maps: the two lane-axis reductions would otherwise make
    # the XLU (not HBM) the saturating unit -> move the sum to the MXU.
    use_mxu_sum = HW <= 256

    out = pl.pallas_call(
        _make_concat_pool_kernel(HW, use_mxu_sum),
        out_shape=jax.ShapeDtypeStruct((bc_padded, 2), dtype),
        grid_spec=pltpu.PrefetchScalarGridSpec(
            num_scalar_prefetch=0,
            grid=(n_tiles,),
            in_specs=[pl.BlockSpec((tile_bc, HW), lambda i: (i, 0))],
            out_specs=pl.BlockSpec((tile_bc, 2), lambda i: (i, 0)),
        ),
        compiler_params=pltpu.CompilerParams(
            dimension_semantics=("parallel",),
        ),
    )(x2d)

    out = out[:BC]
    max_out = out[:, 0].reshape(B, C, 1, 1)
    avg_out = out[:, 1].reshape(B, C, 1, 1)
    # torch.cat([max_pool(x), avg_pool(x)], dim=1)
    return jnp.concatenate([max_out, avg_out], axis=1)


if __name__ == "__main__":
    key = jax.random.PRNGKey(0)
    x = jax.random.normal(key, (2, 4, 16, 16), dtype=jnp.float32)

    out = adaptive_concat_pool2d(x, output_size=1)
    out = jax.block_until_ready(out)

    # sanity check against plain JAX reference
    ref_max = jnp.max(x, axis=(2, 3), keepdims=True)
    ref_avg = jnp.mean(x, axis=(2, 3), keepdims=True)
    ref = jnp.concatenate([ref_max, ref_avg], axis=1)

    assert out.shape == (2, 8, 1, 1), out.shape
    assert jnp.allclose(out, ref, atol=1e-5, rtol=1e-5)

    # also exercise a case where BC is tiled across several grid steps and
    # needs row padding (BC = 96, HW = 49 -> non-128-multiple lanes)
    x2 = jax.random.normal(key, (12, 8, 7, 7), dtype=jnp.float32)
    out2 = jax.block_until_ready(adaptive_concat_pool2d(x2))
    ref2 = jnp.concatenate(
        [jnp.max(x2, axis=(2, 3), keepdims=True),
         jnp.mean(x2, axis=(2, 3), keepdims=True)], axis=1)
    assert out2.shape == (12, 16, 1, 1), out2.shape
    assert jnp.allclose(out2, ref2, atol=1e-5, rtol=1e-5)

    print("KERNEL_OK")
</pallas_src>

<mosaic_0001>
module attributes {stable_mosaic.version = 11 : i64} {
  func.func @kernel(%arg0: i32, %arg1: memref<8x256xf32, #tpu.memory_space<vmem>>, %arg2: memref<8x2xf32, #tpu.memory_space<vmem>>) attributes {dimension_semantics = [#tpu.dimension_semantics<parallel>], iteration_bounds = array<i64: 1>, scalar_prefetch = 0 : i64, scratch_operands = 0 : i64, tpu.core_type = #tpu.core_type<tc>, window_params = [{transform_indices = @transform_0, window_bounds = array<i64: 8, 256>}, {transform_indices = @transform_1, window_bounds = array<i64: 8, 2>}]} {
    %c0 = arith.constant 0 : index
    %c0_0 = arith.constant 0 : index
    %0 = vector.load %arg1[%c0, %c0_0] : memref<8x256xf32, #tpu.memory_space<vmem>>, vector<8x256xf32>
    %cst = arith.constant dense<0xFF800000> : vector<8xf32>
    %1 = vector.multi_reduction <maximumf>, %0, %cst [1] : vector<8x256xf32> to vector<8xf32>
    %2 = vector.shape_cast %1 : vector<8xf32> to vector<8x1xf32>
    %cst_1 = arith.constant 1.000000e+00 : f32
    %3 = vector.broadcast %cst_1 : f32 to vector<256x1xf32>
    %cst_2 = arith.constant dense<0.000000e+00> : vector<8x1xf32>
    %4 = tpu.matmul %0, %3, %cst_2 {dimension_numbers = #tpu.dot_dimension_numbers<[1], [0], [0], [1], [0, 0, 1, 1], [], []>} : vector<8x256xf32>, vector<256x1xf32>, vector<8x1xf32> -> vector<8x1xf32>
    %cst_3 = arith.constant 3.906250e-03 : f32
    %5 = vector.broadcast %cst_3 : f32 to vector<8x1xf32>
    %6 = arith.mulf %4, %5 : vector<8x1xf32>
    %7 = tpu.concatenate %2, %6 in 1 : vector<8x1xf32>, vector<8x1xf32> -> vector<8x2xf32>
    %c0_4 = arith.constant 0 : index
    %c0_5 = arith.constant 0 : index
    %8 = vector.load %arg2[%c0_4, %c0_5] : memref<8x2xf32, #tpu.memory_space<vmem>>, vector<8x2xf32>
    tpu.vector_store %arg2[%c0_4, %c0_5], %7 {strides = array<i32>} : memref<8x2xf32, #tpu.memory_space<vmem>>, vector<8x2xf32>,
    return
  }
  func.func @transform_0(%arg0: i32) -> (i32, i32) {
    %c0_i32 = arith.constant 0 : i32
    %c0_i32_0 = arith.constant 0 : i32
    return %arg0, %c0_i32 : i32, i32
  }
  func.func @transform_1(%arg0: i32) -> (i32, i32) {
    %c0_i32 = arith.constant 0 : i32
    %c0_i32_0 = arith.constant 0 : i32
    return %arg0, %c0_i32 : i32, i32
  }
}

</mosaic_0001>

<llo_original>
// kernel: squeeze.2
$region0: #{squeeze.2}
  %s0 = inlined_call_operand.vmem [shape: f32[8], index: 0, kind: input, shape index: {}]
  %s1 = inlined_call_operand.vmem [shape: f32[2,4,1,1], index: 1, kind: output, shape index: {}]
  $region1: #{squeeze.2} parent=0
    #allocation0 [shape = 'u8[4096]{0}', space=vmem, size = 0x1000, scoped, tag = 'scoped mem for output reshape']
    #allocation1 [shape = 'u8[4096]{0}', space=vmem, size = 0x1000, scoped, tag = 'scoped mem for input reshape']
    %s3 = sshllo.u32 0, 1
    %v4 = vld [vmem:[%s0] sm:%s3]
    %5 = vst [vmem:[#allocation1] sm:%s3] %v4
    %v6 = vld [vmem:[#allocation1] sm:$0x1]
    %vm7 = vcmask 31744
    %8 = vst.msk [vmem:[#allocation0] sm:$0x1] %vm7, %v6
    %v9 = vld [vmem:[#allocation1] sm:$0x1]
    %10 = vrot.lane.b32.xlu0 %v9, 124
    %v11 = vpop.permute.xlu0 %10
    %vm12 = vcmask 31744
    %s13 = scalar_lea.vmem [#allocation0], 1
    %14 = vst.msk [vmem:[%s13] sm:$0x1] %vm12, %v11
    %s16 = sshllo.u32 0, 2
    %v18 = vld [vmem:[#allocation0] sm:%s16]
    %s19 = sshllo.u32 0, 2
    %20 = vst [vmem:[%s1] sm:%s19] %v18

// kernel: adaptive_concat_pool2d.1
$region0: #{adaptive_concat_pool2d.1}
  #allocation0 [shape = 'u32[]', space=smem, size = 0x4, offset = 0x4, fixed_abs, tag = 'smem constant byte address 0x4 - core index']
  #allocation1 [shape = 'u32[144,128]{1,0:T(1,128)}', space=vmem, size = 0x12000, scoped, tag = 'internal scratch']
  %s0 = inlined_call_operand.vmem [shape: f32[8,256], index: 0, kind: input, shape index: {}]
  %s1 = inlined_call_operand.vmem [shape: f32[8,2], index: 1, kind: output, shape index: {}]
  %s2 = sld [smem:[#allocation0]]
  $region14: #{adaptive_concat_pool2d.1} parent=0
    _
  %s4 = ssub.s32 1, %s2
  %s5 = scalar_select 0, %s4, %s2
  // Predicated region
  $region2: #{adaptive_concat_pool2d.1} parent=0 // pred_check
    _
  $region3: #{adaptive_concat_pool2d.1} parent=0 // pred_check_branch
    %7 = sbr.rel (0) target = $region5
  $region4: #{adaptive_concat_pool2d.1} parent=0 // pred_region
    _
  $region5: #{adaptive_concat_pool2d.1} parent=0 // pred_fallthru
    _
  %v8 = vld [vmem:[%s0] sm:$0xff]
  %v9 = vld [vmem:[%s0 + $0x8] sm:$0xff]
  %v10 = vmax.f32 %v8, %v9
  %11 = vmax.xlane.f32.xlu0 %v10
  %v12 = vpop.xlane.xlu0 %11
  %13 = vmatprep.subr.mxu0 0.0
  %14 = vmatpush1.msra.mxu0 1.0
  %15 = vmatprep.subr.mxu0 0.0
  %16 = vmatpush1.msra.mxu0 1.0
  %17 = vmatprep.subr.mxu0 0.0
  %18 = vmatpush1.msra.mxu0 1.0
  %19 = vmatprep.subr.mxu0 0.0
  %20 = vmatpush1.msra.mxu0 1.0
  %21 = vmatprep.subr.mxu0 0.0
  %22 = vmatpush1.msra.mxu0 1.0
  %23 = vmatprep.subr.mxu0 0.0
  %24 = vmatpush1.msra.mxu0 1.0
  %25 = vmatprep.subr.mxu0 0.0
  %26 = vmatpush1.msra.mxu0 1.0
  %27 = vmatprep.subr.mxu0 0.0
  %28 = vmatpush1.msra.mxu0 1.0
  %29 = vmatprep.subr.mxu0 0.0
  %30 = vmatpush1.msra.mxu0 1.0
  %31 = vmatprep.subr.mxu0 0.0
  %32 = vmatpush1.msra.mxu0 1.0
  %33 = vmatprep.subr.mxu0 0.0
  %34 = vmatpush1.msra.mxu0 1.0
  %35 = vmatprep.subr.mxu0 0.0
  %36 = vmatpush1.msra.mxu0 1.0
  %37 = vmatprep.subr.mxu0 0.0
  %38 = vmatpush1.msra.mxu0 1.0
  %39 = vmatprep.subr.mxu0 0.0
  %40 = vmatpush1.msra.mxu0 1.0
  %41 = vmatprep.subr.mxu0 0.0
  %42 = vmatpush1.msra.mxu0 1.0
  %43 = vmatprep.subr.mxu0 0.0
  %44 = vmatpush1.msra.mxu0 1.0
  %45 = vmatprep.subr.mxu0 0.0
  %46 = vmatpush1.msra.mxu0 1.0
  %47 = vmatprep.subr.mxu0 0.0
  %48 = vmatpush1.msra.mxu0 1.0
  %49 = vmatprep.subr.mxu0 0.0
  %50 = vmatpush1.msra.mxu0 1.0
  %51 = vmatprep.subr.mxu0 0.0
  %52 = vmatpush1.msra.mxu0 1.0
  %53 = vmatprep.subr.mxu0 0.0
  %54 = vmatpush1.msra.mxu0 1.0
  %55 = vmatprep.subr.mxu0 0.0
  %56 = vmatpush1.msra.mxu0 1.0
  %57 = vmatprep.subr.mxu0 0.0
  %58 = vmatpush1.msra.mxu0 1.0
  %59 = vmatprep.subr.mxu0 0.0
  %60 = vmatpush1.msra.mxu0 1.0
  %61 = vmatprep.subr.mxu0 0.0
  %62 = vmatpush1.msra.mxu0 1.0
  %63 = vmatprep.subr.mxu0 0.0
  %64 = vmatpush1.msra.mxu0 1.0
  %65 = vmatprep.subr.mxu0 0.0
  %66 = vmatpush1.msra.mxu0 1.0
  %67 = vmatprep.subr.mxu0 0.0
  %68 = vmatpush1.msra.mxu0 1.0
  %69 = vmatprep.subr.mxu0 0.0
  %70 = vmatpush1.msra.mxu0 1.0
  %71 = vmatprep.subr.mxu0 0.0
  %72 = vmatpush1.msra.mxu0 1.0
  %73 = vmatprep.subr.mxu0 0.0
  %74 = vmatpush1.msra.mxu0 1.0
  %75 = vmatprep.subr.mxu0 0.0
  %76 = vmatpush1.msra.mxu0 1.0
  %77 = vmatprep.mubr.f32.mxu0 %v9
  %78 = vmatmul.mubr.f32.gmra.mrb[0].mxu0 %v8
  %v79 = vpop.f32.mrb[0].mxu0
  %v80 = vadd.f32 0.0, %v79
  %v81 = vpop.f32.mrb[0].mxu0
  %82 = vdwg.mxu0
  %v83 = vmul.f32 %v80, 0.00390625
  %85 = vrot.lane.b32.xlu0 %v83, 1
  %v86 = vpop.permute.xlu0 %85
  %vm88 = vcmask 7168
  %v89 = vsel %vm88, %v12, %v86
  %vm90 = vcmask 15360
  %91 = vst.msk [vmem:[%s1] sm:$0xff] %vm90, %v89
  // Predicated region
  $region6: #{adaptive_concat_pool2d.1} parent=0 // pred_check
    _
  $region7: #{adaptive_concat_pool2d.1} parent=0 // pred_check_branch
    %93 = sbr.rel (0) target = $region9
  $region8: #{adaptive_concat_pool2d.1} parent=0 // pred_region
    _
  $region9: #{adaptive_concat_pool2d.1} parent=0 // pred_fallthru
    _
  // Predicated region
  $region10: #{adaptive_concat_pool2d.1} parent=0 // pred_check
    _
  $region11: #{adaptive_concat_pool2d.1} parent=0 // pred_check_branch
    %95 = sbr.rel (0) target = $region13
  $region12: #{adaptive_concat_pool2d.1} parent=0 // pred_region
    _
  $region13: #{adaptive_concat_pool2d.1} parent=0 // pred_fallthru
    _

</llo_original>
